<compile_context>
chip_gen: v5e
topology: v5e:2x2
jax: 0.10.0
libtpu: 0.0.40
codegen_flags: <defaults>
</compile_context>

<pallas_src>
import numpy as np
import jax
import jax.numpy as jnp
from jax.experimental import pallas as pl
from jax.experimental.pallas import tpu as pltpu

HIDDEN = 32        # hidden_size (small for the demo; tutorial uses 256)
OUTPUT = 40        # output_size (vocab)
MAX_LENGTH = 10    # max_length

# 128-lane-aligned sections inside the packed weight slab (HIDDEN rows each):
#   EMB_SEC: [Wa_e (L) | Wc_e (H)]            multiplied by embedded token
#   HID_SEC: [Wa_h (L) | Whr | Whz | Whn]     multiplied by hidden state
#   X_SEC  : [Wir | Wiz | Win]                multiplied by relu(attn_combine(.))
#   CA_SEC : [Wc_a (H)]                       multiplied by attn_applied
#   O_SEC  : [Wo  (V)]                        multiplied by new hidden state
EMB_SEC, HID_SEC, X_SEC, CA_SEC, O_SEC = 0, 128, 256, 384, 512
W_COLS = 640  # 5 * 128


def attn_decoder_kernel(idx_ref, hid_ref, enc_ref, emb_tab_ref, w_ref, b_ref,
                        out_ref):
    H, L, V = HIDDEN, MAX_LENGTH, OUTPUT
    hid = hid_ref[...]            # (1, H)
    b = b_ref[...]                # (8, 128) packed biases

    # ---- fused embedding lookup: one-hot row select on the MXU ----
    idx = idx_ref[0]
    onehot = (jax.lax.broadcasted_iota(jnp.int32, (1, V), 1) == idx
              ).astype(jnp.float32)
    emb = jnp.dot(onehot, emb_tab_ref[...],
                  preferred_element_type=jnp.float32)          # (1, H)
    # dropout(p=0.1): eval-mode identity.

    # ---- two fused "by-LHS" dots over 128-lane aligned weight sections ----
    emb_out = jnp.dot(emb, w_ref[:, EMB_SEC:EMB_SEC + 128],
                      preferred_element_type=jnp.float32)      # (1, 128)
    hid_out = jnp.dot(hid, w_ref[:, HID_SEC:HID_SEC + 128],
                      preferred_element_type=jnp.float32)      # (1, 128)

    # attn_weights = softmax(Linear([emb ; hid]))               -> (1, L)
    logits = emb_out[:, 0:L] + hid_out[:, 0:L] + b[0:1, 0:L]
    logits = logits - jnp.max(logits, axis=1, keepdims=True)
    e = jnp.exp(logits)
    attn = e / jnp.sum(e, axis=1, keepdims=True)

    # attn_applied = attn_weights @ encoder_outputs             -> (1, H)
    attn_applied = jnp.dot(attn, enc_ref[...],
                           preferred_element_type=jnp.float32)

    # x = relu(attn_combine([emb ; attn_applied]))              -> (1, H)
    ca = jnp.dot(attn_applied, w_ref[:, CA_SEC:CA_SEC + 128],
                 preferred_element_type=jnp.float32)
    x = jnp.maximum(emb_out[:, L:L + H] + ca[:, 0:H] + b[0:1, L:L + H], 0.0)

    # ---- single-step GRU, gates packed (r, z, n) ----
    gi = jnp.dot(x, w_ref[:, X_SEC:X_SEC + 128],
                 preferred_element_type=jnp.float32)[:, 0:3 * H] + b[1:2, 0:3 * H]
    gh = hid_out[:, L:L + 3 * H] + b[2:3, 0:3 * H]
    r = jax.nn.sigmoid(gi[:, 0:H] + gh[:, 0:H])
    z = jax.nn.sigmoid(gi[:, H:2 * H] + gh[:, H:2 * H])
    n = jnp.tanh(gi[:, 2 * H:3 * H] + r * gh[:, 2 * H:3 * H])
    h_new = (1.0 - z) * n + z * hid

    # log_softmax(out(h_new))                                   -> (1, V)
    o = jnp.dot(h_new, w_ref[:, O_SEC:O_SEC + 128],
                preferred_element_type=jnp.float32)[:, 0:V] + b[3:4, 0:V]
    o = o - jnp.max(o, axis=1, keepdims=True)
    logp = o - jnp.log(jnp.sum(jnp.exp(o), axis=1, keepdims=True))

    # ---- single lane-dense (1, 128) packed output ----
    out_ref[:, 0:V] = logp
    out_ref[:, V:V + H] = h_new
    out_ref[:, V + H:V + H + L] = attn
    out_ref[:, V + H + L:] = jnp.zeros((1, 128 - (V + H + L)), jnp.float32)


def attn_decoder_forward(input_idx, hidden, encoder_outputs, packed):
    """input_idx: int32 scalar; hidden: (1,1,H); encoder_outputs: (L,H)."""
    H, L, V = HIDDEN, MAX_LENGTH, OUTPUT
    idx = jnp.asarray(input_idx, jnp.int32).reshape(1)
    hid2d = hidden.reshape(1, H)

    smem = pl.BlockSpec(memory_space=pltpu.MemorySpace.SMEM)
    vmem = pl.BlockSpec(memory_space=pltpu.MemorySpace.VMEM)

    out = pl.pallas_call(
        attn_decoder_kernel,
        out_shape=jax.ShapeDtypeStruct((1, 128), jnp.float32),
        in_specs=[smem, vmem, vmem, vmem, vmem, vmem],
        out_specs=vmem,
    )(idx, hid2d, encoder_outputs, packed["emb"], packed["w"], packed["b"])

    logp = out[:, 0:V]
    h_new = out[:, V:V + H].reshape(1, 1, H)
    attn = out[:, V + H:V + H + L]
    return logp, h_new, attn


def reference_forward(input_idx, hidden, encoder_outputs, p):
    """Pure-JAX reference mirroring the PyTorch forward (unpacked params)."""
    H = HIDDEN
    emb = p["embedding"][input_idx].reshape(1, H)
    hid = hidden.reshape(1, H)
    logits = emb @ p["wa_e"] + hid @ p["wa_h"] + p["ba"]
    attn = jax.nn.softmax(logits, axis=1)
    attn_applied = attn @ encoder_outputs
    x = jnp.maximum(emb @ p["wc_e"] + attn_applied @ p["wc_a"] + p["bc"], 0.0)
    r = jax.nn.sigmoid(x @ p["wir"] + p["bir"] + hid @ p["whr"] + p["bhr"])
    z = jax.nn.sigmoid(x @ p["wiz"] + p["biz"] + hid @ p["whz"] + p["bhz"])
    n = jnp.tanh(x @ p["win"] + p["bin"] + r * (hid @ p["whn"] + p["bhn"]))
    h_new = (1.0 - z) * n + z * hid
    o = h_new @ p["wo"] + p["bo"]
    return jax.nn.log_softmax(o, axis=1), h_new.reshape(1, 1, H), attn


def init_params(key):
    H, L, V = HIDDEN, MAX_LENGTH, OUTPUT
    ks = jax.random.split(key, 24)
    u = lambda k, shape, fan: jax.random.uniform(
        k, shape, jnp.float32, -1.0 / np.sqrt(fan), 1.0 / np.sqrt(fan))
    p = {}
    p["embedding"] = jax.random.normal(ks[0], (V, H), jnp.float32)
    # attn: Linear(2H -> L), split into embedded / hidden halves, pre-transposed
    p["wa_e"] = u(ks[1], (H, L), 2 * H)
    p["wa_h"] = u(ks[2], (H, L), 2 * H)
    p["ba"] = u(ks[3], (1, L), 2 * H)
    # attn_combine: Linear(2H -> H), split
    p["wc_e"] = u(ks[4], (H, H), 2 * H)
    p["wc_a"] = u(ks[5], (H, H), 2 * H)
    p["bc"] = u(ks[6], (1, H), 2 * H)
    # GRU gates (r, z, n)
    names = ["wir", "wiz", "win", "whr", "whz", "whn",
             "bir", "biz", "bin", "bhr", "bhz", "bhn"]
    for i, name in enumerate(names):
        shape = (H, H) if name.startswith("w") else (1, H)
        p[name] = u(ks[7 + i], shape, H)
    # out: Linear(H -> V)
    p["wo"] = u(ks[19], (H, V), H)
    p["bo"] = u(ks[20], (1, V), H)
    return p


def pack_params(p):
    """Pack unpacked params into the 3 slabs the kernel consumes."""
    H, L, V = HIDDEN, MAX_LENGTH, OUTPUT
    w = np.zeros((H, W_COLS), np.float32)
    # emb-LHS section
    w[:, EMB_SEC + 0:EMB_SEC + L] = np.asarray(p["wa_e"])
    w[:, EMB_SEC + L:EMB_SEC + L + H] = np.asarray(p["wc_e"])
    # hid-LHS section
    w[:, HID_SEC + 0:HID_SEC + L] = np.asarray(p["wa_h"])
    w[:, HID_SEC + L + 0 * H:HID_SEC + L + 1 * H] = np.asarray(p["whr"])
    w[:, HID_SEC + L + 1 * H:HID_SEC + L + 2 * H] = np.asarray(p["whz"])
    w[:, HID_SEC + L + 2 * H:HID_SEC + L + 3 * H] = np.asarray(p["whn"])
    # x-LHS section (GRU input gates)
    w[:, X_SEC + 0 * H:X_SEC + 1 * H] = np.asarray(p["wir"])
    w[:, X_SEC + 1 * H:X_SEC + 2 * H] = np.asarray(p["wiz"])
    w[:, X_SEC + 2 * H:X_SEC + 3 * H] = np.asarray(p["win"])
    # attn_applied-LHS section
    w[:, CA_SEC:CA_SEC + H] = np.asarray(p["wc_a"])
    # h_new-LHS section (output projection)
    w[:, O_SEC:O_SEC + V] = np.asarray(p["wo"])

    b = np.zeros((8, 128), np.float32)
    b[0, 0:L] = np.asarray(p["ba"])[0]
    b[0, L:L + H] = np.asarray(p["bc"])[0]
    b[1, 0 * H:1 * H] = np.asarray(p["bir"])[0]
    b[1, 1 * H:2 * H] = np.asarray(p["biz"])[0]
    b[1, 2 * H:3 * H] = np.asarray(p["bin"])[0]
    b[2, 0 * H:1 * H] = np.asarray(p["bhr"])[0]
    b[2, 1 * H:2 * H] = np.asarray(p["bhz"])[0]
    b[2, 2 * H:3 * H] = np.asarray(p["bhn"])[0]
    b[3, 0:V] = np.asarray(p["bo"])[0]

    return {"emb": jnp.asarray(p["embedding"]),
            "w": jnp.asarray(w),
            "b": jnp.asarray(b)}


if __name__ == "__main__":
    key = jax.random.PRNGKey(0)
    pkey, ekey, hkey = jax.random.split(key, 3)
    params = init_params(pkey)
    packed = pack_params(params)

    input_idx = jnp.int32(7)                                        # token id
    hidden = jax.random.normal(hkey, (1, 1, HIDDEN), jnp.float32)   # (1,1,H)
    encoder_outputs = jax.random.normal(ekey, (MAX_LENGTH, HIDDEN), jnp.float32)

    logp, h_new, attn = attn_decoder_forward(input_idx, hidden,
                                             encoder_outputs, packed)
    jax.block_until_ready((logp, h_new, attn))

    ref_logp, ref_h, ref_attn = reference_forward(input_idx, hidden,
                                                  encoder_outputs, params)
    np.testing.assert_allclose(np.asarray(logp), np.asarray(ref_logp),
                               atol=1e-5, rtol=1e-5)
    np.testing.assert_allclose(np.asarray(h_new), np.asarray(ref_h),
                               atol=1e-5, rtol=1e-5)
    np.testing.assert_allclose(np.asarray(attn), np.asarray(ref_attn),
                               atol=1e-5, rtol=1e-5)

    print("KERNEL_OK")
</pallas_src>

<mosaic_0001>
module attributes {stable_mosaic.version = 11 : i64} {
  func.func @attn_decoder_kernel(%arg0: memref<1xi32, #tpu.memory_space<smem>>, %arg1: memref<1x32xf32, #tpu.memory_space<vmem>>, %arg2: memref<10x32xf32, #tpu.memory_space<vmem>>, %arg3: memref<40x32xf32, #tpu.memory_space<vmem>>, %arg4: memref<32x640xf32, #tpu.memory_space<vmem>>, %arg5: memref<8x128xf32, #tpu.memory_space<vmem>>, %arg6: memref<1x128xf32, #tpu.memory_space<vmem>>) attributes {dimension_semantics = [], scalar_prefetch = 0 : i64, scratch_operands = 0 : i64, tpu.core_type = #tpu.core_type<tc>} {
    %c0 = arith.constant 0 : index
    %c0_0 = arith.constant 0 : index
    %0 = vector.load %arg1[%c0, %c0_0] : memref<1x32xf32, #tpu.memory_space<vmem>>, vector<1x32xf32>
    %c0_1 = arith.constant 0 : index
    %c0_2 = arith.constant 0 : index
    %1 = vector.load %arg5[%c0_1, %c0_2] : memref<8x128xf32, #tpu.memory_space<vmem>>, vector<8x128xf32>
    %c0_3 = arith.constant 0 : index
    %2 = memref.load %arg0[%c0_3] : memref<1xi32, #tpu.memory_space<smem>>
    %3 = tpu.iota {dimensions = array<i32: 1>} : vector<1x40xi32>
    %4 = vector.broadcast %2 : i32 to vector<1x40xi32>
    %5 = arith.cmpi eq, %3, %4 : vector<1x40xi32>
    %6 = arith.extui %5 : vector<1x40xi1> to vector<1x40xi32>
    %7 = arith.sitofp %6 : vector<1x40xi32> to vector<1x40xf32>
    %c0_4 = arith.constant 0 : index
    %c0_5 = arith.constant 0 : index
    %8 = vector.load %arg3[%c0_4, %c0_5] : memref<40x32xf32, #tpu.memory_space<vmem>>, vector<40x32xf32>
    %cst = arith.constant dense<0.000000e+00> : vector<1x32xf32>
    %9 = tpu.matmul %7, %8, %cst {dimension_numbers = #tpu.dot_dimension_numbers<[1], [0], [0], [1], [0, 0, 1, 1], [], []>} : vector<1x40xf32>, vector<40x32xf32>, vector<1x32xf32> -> vector<1x32xf32>
    %c0_6 = arith.constant 0 : index
    %c0_7 = arith.constant 0 : index
    %10 = vector.load %arg4[%c0_6, %c0_7] : memref<32x640xf32, #tpu.memory_space<vmem>>, vector<32x128xf32>
    %cst_8 = arith.constant dense<0.000000e+00> : vector<1x128xf32>
    %11 = tpu.matmul %9, %10, %cst_8 {dimension_numbers = #tpu.dot_dimension_numbers<[1], [0], [0], [1], [0, 0, 1, 1], [], []>} : vector<1x32xf32>, vector<32x128xf32>, vector<1x128xf32> -> vector<1x128xf32>
    %c0_9 = arith.constant 0 : index
    %c128 = arith.constant 128 : index
    %12 = vector.load %arg4[%c0_9, %c128] : memref<32x640xf32, #tpu.memory_space<vmem>>, vector<32x128xf32>
    %cst_10 = arith.constant dense<0.000000e+00> : vector<1x128xf32>
    %13 = tpu.matmul %0, %12, %cst_10 {dimension_numbers = #tpu.dot_dimension_numbers<[1], [0], [0], [1], [0, 0, 1, 1], [], []>} : vector<1x32xf32>, vector<32x128xf32>, vector<1x128xf32> -> vector<1x128xf32>
    %14 = vector.extract_strided_slice %11 {offsets = [0, 0], sizes = [1, 10], strides = [1, 1]} : vector<1x128xf32> to vector<1x10xf32>
    %15 = vector.extract_strided_slice %13 {offsets = [0, 0], sizes = [1, 10], strides = [1, 1]} : vector<1x128xf32> to vector<1x10xf32>
    %16 = arith.addf %14, %15 : vector<1x10xf32>
    %17 = vector.extract_strided_slice %1 {offsets = [0, 0], sizes = [1, 10], strides = [1, 1]} : vector<8x128xf32> to vector<1x10xf32>
    %18 = arith.addf %16, %17 : vector<1x10xf32>
    %cst_11 = arith.constant dense<0xFF800000> : vector<1xf32>
    %19 = vector.multi_reduction <maximumf>, %18, %cst_11 [1] : vector<1x10xf32> to vector<1xf32>
    %20 = vector.shape_cast %19 : vector<1xf32> to vector<1x1xf32>
    %21 = vector.broadcast %20 : vector<1x1xf32> to vector<1x10xf32>
    %22 = arith.subf %18, %21 : vector<1x10xf32>
    %23 = math.exp %22 : vector<1x10xf32>
    %cst_12 = arith.constant dense<0.000000e+00> : vector<1xf32>
    %24 = vector.multi_reduction <add>, %23, %cst_12 [1] : vector<1x10xf32> to vector<1xf32>
    %25 = vector.shape_cast %24 : vector<1xf32> to vector<1x1xf32>
    %26 = vector.broadcast %25 : vector<1x1xf32> to vector<1x10xf32>
    %27 = arith.divf %23, %26 : vector<1x10xf32>
    %c0_13 = arith.constant 0 : index
    %c0_14 = arith.constant 0 : index
    %28 = vector.load %arg2[%c0_13, %c0_14] : memref<10x32xf32, #tpu.memory_space<vmem>>, vector<10x32xf32>
    %cst_15 = arith.constant dense<0.000000e+00> : vector<1x32xf32>
    %29 = tpu.matmul %27, %28, %cst_15 {dimension_numbers = #tpu.dot_dimension_numbers<[1], [0], [0], [1], [0, 0, 1, 1], [], []>} : vector<1x10xf32>, vector<10x32xf32>, vector<1x32xf32> -> vector<1x32xf32>
    %c0_16 = arith.constant 0 : index
    %c384 = arith.constant 384 : index
    %30 = vector.load %arg4[%c0_16, %c384] : memref<32x640xf32, #tpu.memory_space<vmem>>, vector<32x128xf32>
    %cst_17 = arith.constant dense<0.000000e+00> : vector<1x128xf32>
    %31 = tpu.matmul %29, %30, %cst_17 {dimension_numbers = #tpu.dot_dimension_numbers<[1], [0], [0], [1], [0, 0, 1, 1], [], []>} : vector<1x32xf32>, vector<32x128xf32>, vector<1x128xf32> -> vector<1x128xf32>
    %32 = vector.extract_strided_slice %11 {offsets = [0, 10], sizes = [1, 32], strides = [1, 1]} : vector<1x128xf32> to vector<1x32xf32>
    %33 = vector.extract_strided_slice %31 {offsets = [0, 0], sizes = [1, 32], strides = [1, 1]} : vector<1x128xf32> to vector<1x32xf32>
    %34 = arith.addf %32, %33 : vector<1x32xf32>
    %35 = vector.extract_strided_slice %1 {offsets = [0, 10], sizes = [1, 32], strides = [1, 1]} : vector<8x128xf32> to vector<1x32xf32>
    %36 = arith.addf %34, %35 : vector<1x32xf32>
    %cst_18 = arith.constant 0.000000e+00 : f32
    %37 = vector.broadcast %cst_18 : f32 to vector<1x32xf32>
    %38 = arith.maximumf %36, %37 : vector<1x32xf32>
    %c0_19 = arith.constant 0 : index
    %c256 = arith.constant 256 : index
    %39 = vector.load %arg4[%c0_19, %c256] : memref<32x640xf32, #tpu.memory_space<vmem>>, vector<32x128xf32>
    %cst_20 = arith.constant dense<0.000000e+00> : vector<1x128xf32>
    %40 = tpu.matmul %38, %39, %cst_20 {dimension_numbers = #tpu.dot_dimension_numbers<[1], [0], [0], [1], [0, 0, 1, 1], [], []>} : vector<1x32xf32>, vector<32x128xf32>, vector<1x128xf32> -> vector<1x128xf32>
    %41 = vector.extract_strided_slice %40 {offsets = [0, 0], sizes = [1, 96], strides = [1, 1]} : vector<1x128xf32> to vector<1x96xf32>
    %42 = vector.extract_strided_slice %1 {offsets = [1, 0], sizes = [1, 96], strides = [1, 1]} : vector<8x128xf32> to vector<1x96xf32>
    %43 = arith.addf %41, %42 : vector<1x96xf32>
    %44 = vector.extract_strided_slice %13 {offsets = [0, 10], sizes = [1, 96], strides = [1, 1]} : vector<1x128xf32> to vector<1x96xf32>
    %45 = vector.extract_strided_slice %1 {offsets = [2, 0], sizes = [1, 96], strides = [1, 1]} : vector<8x128xf32> to vector<1x96xf32>
    %46 = arith.addf %44, %45 : vector<1x96xf32>
    %47 = vector.extract_strided_slice %43 {offsets = [0, 0], sizes = [1, 32], strides = [1, 1]} : vector<1x96xf32> to vector<1x32xf32>
    %48 = vector.extract_strided_slice %46 {offsets = [0, 0], sizes = [1, 32], strides = [1, 1]} : vector<1x96xf32> to vector<1x32xf32>
    %49 = arith.addf %47, %48 : vector<1x32xf32>
    %50 = arith.negf %49 : vector<1x32xf32>
    %51 = math.exp %50 : vector<1x32xf32>
    %cst_21 = arith.constant 1.000000e+00 : f32
    %52 = vector.broadcast %cst_21 : f32 to vector<1x32xf32>
    %53 = arith.addf %52, %51 : vector<1x32xf32>
    %54 = arith.divf %52, %53 : vector<1x32xf32>
    %55 = vector.extract_strided_slice %43 {offsets = [0, 32], sizes = [1, 32], strides = [1, 1]} : vector<1x96xf32> to vector<1x32xf32>
    %56 = vector.extract_strided_slice %46 {offsets = [0, 32], sizes = [1, 32], strides = [1, 1]} : vector<1x96xf32> to vector<1x32xf32>
    %57 = arith.addf %55, %56 : vector<1x32xf32>
    %58 = arith.negf %57 : vector<1x32xf32>
    %59 = math.exp %58 : vector<1x32xf32>
    %cst_22 = arith.constant 1.000000e+00 : f32
    %60 = vector.broadcast %cst_22 : f32 to vector<1x32xf32>
    %61 = arith.addf %60, %59 : vector<1x32xf32>
    %62 = arith.divf %60, %61 : vector<1x32xf32>
    %63 = vector.extract_strided_slice %43 {offsets = [0, 64], sizes = [1, 32], strides = [1, 1]} : vector<1x96xf32> to vector<1x32xf32>
    %64 = vector.extract_strided_slice %46 {offsets = [0, 64], sizes = [1, 32], strides = [1, 1]} : vector<1x96xf32> to vector<1x32xf32>
    %65 = arith.mulf %54, %64 : vector<1x32xf32>
    %66 = arith.addf %63, %65 : vector<1x32xf32>
    %67 = math.tanh %66 : vector<1x32xf32>
    %cst_23 = arith.constant 1.000000e+00 : f32
    %68 = vector.broadcast %cst_23 : f32 to vector<1x32xf32>
    %69 = arith.subf %68, %62 : vector<1x32xf32>
    %70 = arith.mulf %69, %67 : vector<1x32xf32>
    %71 = arith.mulf %62, %0 : vector<1x32xf32>
    %72 = arith.addf %70, %71 : vector<1x32xf32>
    %c0_24 = arith.constant 0 : index
    %c512 = arith.constant 512 : index
    %73 = vector.load %arg4[%c0_24, %c512] : memref<32x640xf32, #tpu.memory_space<vmem>>, vector<32x128xf32>
    %cst_25 = arith.constant dense<0.000000e+00> : vector<1x128xf32>
    %74 = tpu.matmul %72, %73, %cst_25 {dimension_numbers = #tpu.dot_dimension_numbers<[1], [0], [0], [1], [0, 0, 1, 1], [], []>} : vector<1x32xf32>, vector<32x128xf32>, vector<1x128xf32> -> vector<1x128xf32>
    %75 = vector.extract_strided_slice %74 {offsets = [0, 0], sizes = [1, 40], strides = [1, 1]} : vector<1x128xf32> to vector<1x40xf32>
    %76 = vector.extract_strided_slice %1 {offsets = [3, 0], sizes = [1, 40], strides = [1, 1]} : vector<8x128xf32> to vector<1x40xf32>
    %77 = arith.addf %75, %76 : vector<1x40xf32>
    %cst_26 = arith.constant dense<0xFF800000> : vector<1xf32>
    %78 = vector.multi_reduction <maximumf>, %77, %cst_26 [1] : vector<1x40xf32> to vector<1xf32>
    %79 = vector.shape_cast %78 : vector<1xf32> to vector<1x1xf32>
    %80 = vector.broadcast %79 : vector<1x1xf32> to vector<1x40xf32>
    %81 = arith.subf %77, %80 : vector<1x40xf32>
    %82 = math.exp %81 : vector<1x40xf32>
    %cst_27 = arith.constant dense<0.000000e+00> : vector<1xf32>
    %83 = vector.multi_reduction <add>, %82, %cst_27 [1] : vector<1x40xf32> to vector<1xf32>
    %84 = vector.shape_cast %83 : vector<1xf32> to vector<1x1xf32>
    %85 = math.log %84 : vector<1x1xf32>
    %86 = vector.broadcast %85 : vector<1x1xf32> to vector<1x40xf32>
    %87 = arith.subf %81, %86 : vector<1x40xf32>
    %c0_28 = arith.constant 0 : index
    %c0_29 = arith.constant 0 : index
    %88 = vector.load %arg6[%c0_28, %c0_29] : memref<1x128xf32, #tpu.memory_space<vmem>>, vector<1x40xf32>
    tpu.vector_store %arg6[%c0_28, %c0_29], %87 {strides = array<i32>} : memref<1x128xf32, #tpu.memory_space<vmem>>, vector<1x40xf32>,
    %c0_30 = arith.constant 0 : index
    %c40 = arith.constant 40 : index
    %89 = vector.load %arg6[%c0_30, %c40] : memref<1x128xf32, #tpu.memory_space<vmem>>, vector<1x32xf32>
    tpu.vector_store %arg6[%c0_30, %c40], %72 {strides = array<i32>} : memref<1x128xf32, #tpu.memory_space<vmem>>, vector<1x32xf32>,
    %c0_31 = arith.constant 0 : index
    %c72 = arith.constant 72 : index
    %90 = vector.load %arg6[%c0_31, %c72] : memref<1x128xf32, #tpu.memory_space<vmem>>, vector<1x10xf32>
    tpu.vector_store %arg6[%c0_31, %c72], %27 {strides = array<i32>} : memref<1x128xf32, #tpu.memory_space<vmem>>, vector<1x10xf32>,
    %cst_32 = arith.constant 0.000000e+00 : f32
    %91 = vector.broadcast %cst_32 : f32 to vector<1x46xf32>
    %c0_33 = arith.constant 0 : index
    %c82 = arith.constant 82 : index
    %92 = vector.load %arg6[%c0_33, %c82] : memref<1x128xf32, #tpu.memory_space<vmem>>, vector<1x46xf32>
    tpu.vector_store %arg6[%c0_33, %c82], %91 {strides = array<i32>} : memref<1x128xf32, #tpu.memory_space<vmem>>, vector<1x46xf32>,
    return
  }
}

</mosaic_0001>

<llo_original>
// kernel: tpu_custom_call.1
$region0: #{tpu_custom_call.1}
  #allocation0 [shape = 'u32[]', space=smem, size = 0x4, offset = 0x4, fixed_abs, tag = 'smem constant byte address 0x4 - core index']
  #allocation1 [shape = 'u32[72,128]{1,0:T(1,128)}', space=vmem, size = 0x9000, scoped, tag = 'internal scratch']
  #allocation2 [shape = 's32[1]{0:T(128)S(6)}', space=smem, size = 0x200, scoped, tag = 'scoped memory for tpu_custom_call.1']
  %s0 = inlined_call_operand.<no memory space> [shape: s32[1], index: 0, kind: input, shape index: {}]
  %s1 = inlined_call_operand.vmem [shape: f32[1,32], index: 1, kind: input, shape index: {}]
  %s2 = inlined_call_operand.vmem [shape: f32[10,32], index: 2, kind: input, shape index: {}]
  %s3 = inlined_call_operand.vmem [shape: f32[40,32], index: 3, kind: input, shape index: {}]
  %s4 = inlined_call_operand.hbm [shape: f32[32,640], index: 4, kind: input, shape index: {}]
  %s5 = inlined_call_operand.vmem [shape: f32[8,128], index: 5, kind: input, shape index: {}]
  %s6 = inlined_call_operand.hbm [shape: f32[1,128], index: 6, kind: output, shape index: {}]
  %s7 = sld [smem:[#allocation0]]
  $region38: #{tpu_custom_call.1} parent=0
    _
  %s9 = ssub.s32 1, %s7
  %s10 = scalar_select 0, %s9, %s7
  %11 = sst [smem:[#allocation2]] %s0
  $region1: #{tpu_custom_call.1} parent=0
    #allocation3 [shape = 'u8[81920]{0}', space=vmem, size = 0x14000, scoped, tag = 'input window, operand 4, single buffered']
    #allocation4 [shape = 's32[1]{0}', space=sflag, size = 0x4, scoped, tag = 'scoped memory for tpu_custom_call.1']
    #allocation5 [shape = 's32[1]{0}', space=sflag, size = 0x4, scoped, tag = 'scoped memory for tpu_custom_call.1']
    #allocation6 [shape = 'u8[512]{0}', space=vmem, size = 0x400, scoped, tag = 'output window, operand 0, single buffered']
    %12 = vsyncpa [#allocation4], 0
    %13 = vsyncpa [#allocation5], 0
    // Predicated region
    $region2: #{tpu_custom_call.1} parent=1 // pred_check
      _
    $region3: #{tpu_custom_call.1} parent=1 // pred_check_branch
      %15 = sbr.rel (0) target = $region5
    $region4: #{tpu_custom_call.1} parent=1 // pred_region
      _
    $region5: #{tpu_custom_call.1} parent=1 // pred_fallthru
      _
    // Predicated region
    $region6: #{tpu_custom_call.1} parent=1 // pred_check
      _
    $region7: #{tpu_custom_call.1} parent=1 // pred_check_branch
      %17 = sbr.rel (0) target = $region9
    $region8: #{tpu_custom_call.1} parent=1 // pred_region
      _
    $region9: #{tpu_custom_call.1} parent=1 // pred_fallthru
      _
    // Predicated region
    $region10: #{tpu_custom_call.1} parent=1 // pred_check
      _
    $region11: #{tpu_custom_call.1} parent=1 // pred_check_branch
      %19 = sbr.rel (0) target = $region13
    $region12: #{tpu_custom_call.1} parent=1 // pred_region
      _
    $region13: #{tpu_custom_call.1} parent=1 // pred_fallthru
      _
    // Predicated region
    $region14: #{tpu_custom_call.1} parent=1 // pred_check
      _
    $region15: #{tpu_custom_call.1} parent=1 // pred_check_branch
      %21 = sbr.rel (0) target = $region17
    $region16: #{tpu_custom_call.1} parent=1 // pred_region
      _
    $region17: #{tpu_custom_call.1} parent=1 // pred_fallthru
      _
    // Predicated region
    $region18: #{tpu_custom_call.1} parent=1 // pred_check
      _
    $region19: #{tpu_custom_call.1} parent=1 // pred_check_branch
      %23 = sbr.rel (0) target = $region21
    $region20: #{tpu_custom_call.1} parent=1 // pred_region
      %25 = vsyncadd [#allocation4], 0
      %s26 = sshll.u32 %s4, 4
      %s27 = int_to_ptr.hbm [resolvable:$true] %s26
      %s28 = sshll.u32 [#allocation3], 4
      %s29 = int_to_ptr.vmem [resolvable:$true] %s28
      %34 = dma.hbm_to_vmem [thread:$0]  %s27, 2560, %s29, [#allocation4], 640, 640, 40
    $region21: #{tpu_custom_call.1} parent=1 // pred_fallthru
      _
    // Predicated region
    $region22: #{tpu_custom_call.1} parent=1 // pred_check
      _
    $region23: #{tpu_custom_call.1} parent=1 // pred_check_branch
      %36 = sbr.rel (0) target = $region25
    $region24: #{tpu_custom_call.1} parent=1 // pred_region
      _
    $region25: #{tpu_custom_call.1} parent=1 // pred_fallthru
      _
    // Predicated region
    $region26: #{tpu_custom_call.1} parent=1 // pred_check
      _
    $region27: #{tpu_custom_call.1} parent=1 // pred_check_branch
      %38 = sbr.rel (0) target = $region29
    $region28: #{tpu_custom_call.1} parent=1 // pred_region
      %40 = dma.done [#allocation4], 2560
    $region29: #{tpu_custom_call.1} parent=1 // pred_fallthru
      _
    %v41 = vld [vmem:[%s1] sm:$0x1]
    %v42 = vld [vmem:[%s5] sm:$0xff]
    %s43 = sld [smem:[#allocation2]]
    %v44 = vlaneseq
    %v45 = vand.u32 %v44, 127
    %v46 = vstv %s43
    %vm47 = vcmp.eq.s32.totalorder %v45, %v46
    %v48 = vsel %vm47, 1, 0
    %v49 = vcvt.s32.f32 %v48
    %v50 = vld [vmem:[%s3] sm:$0xff]
    %v51 = vld [vmem:[%s3 + $0x8] sm:$0xff]
    %v52 = vld [vmem:[%s3 + $0x10] sm:$0xff]
    %v53 = vld [vmem:[%s3 + $0x18] sm:$0xff]
    %v54 = vld [vmem:[%s3 + $0x20] sm:$0xff]
    %vm55 = vcmask 326656
    %v57 = vsel %vm55, %v49, 0
    %59 = vmatpush.msra.mxu0 0.0
    %60 = vmatpush.msra.mxu0 0.0
    %61 = vmatpush.msra.mxu0 0.0
    %62 = vmatpush.msra.mxu0 0.0
    %63 = vmatpush.msra.mxu0 0.0
    %64 = vmatpush.msra.mxu0 0.0
    %65 = vmatpush.msra.mxu0 0.0
    %66 = vmatpush.msra.mxu0 0.0
    %67 = vmatpush.msra.mxu0 0.0
    %68 = vmatpush.msra.mxu0 0.0
    %69 = vmatpush.msra.mxu0 0.0
    %70 = vmatpush.msra.mxu0 %v54
    %71 = vmatpush.msra.mxu0 %v53
    %72 = vmatpush.msra.mxu0 %v52
    %73 = vmatpush.msra.mxu0 %v51
    %74 = vmatpush.msra.mxu0 %v50
    %75 = vmatmul.f32.gmra.mxu0 %v57
    %v76 = vpop.f32.mrf.mxu0
    %v77 = vadd.f32 0.0, %v76
    %78 = vdwg.mxu0
    %v79 = vld [vmem:[#allocation3] sm:$0xff]
    %v80 = vld [vmem:[#allocation3 + $0x28] sm:$0xff]
    %v81 = vld [vmem:[#allocation3 + $0x50] sm:$0xff]
    %v82 = vld [vmem:[#allocation3 + $0x78] sm:$0xff]
    %vm83 = vcmask 261120
    %v85 = vsel %vm83, %v77, 0
    %87 = vmatpush.msra.mxu0 0.0
    %88 = vmatpush.msra.mxu0 0.0
    %89 = vmatpush.msra.mxu0 0.0
    %90 = vmatpush.msra.mxu0 0.0
    %91 = vmatpush.msra.mxu0 0.0
    %92 = vmatpush.msra.mxu0 0.0
    %93 = vmatpush.msra.mxu0 0.0
    %94 = vmatpush.msra.mxu0 0.0
    %95 = vmatpush.msra.mxu0 0.0
    %96 = vmatpush.msra.mxu0 0.0
    %97 = vmatpush.msra.mxu0 0.0
    %98 = vmatpush.msra.mxu0 0.0
    %99 = vmatpush.msra.mxu0 %v82
    %100 = vmatpush.msra.mxu0 %v81
    %101 = vmatpush.msra.mxu0 %v80
    %102 = vmatpush.msra.mxu0 %v79
    %103 = vmatmul.f32.gmra.mxu0 %v85
    %v104 = vpop.f32.mrf.mxu0
    %v105 = vadd.f32 0.0, %v104
    %106 = vdwg.mxu0
    %v107 = vld [vmem:[#allocation3 + $0x8] sm:$0xff]
    %v108 = vld [vmem:[#allocation3 + $0x30] sm:$0xff]
    %v109 = vld [vmem:[#allocation3 + $0x58] sm:$0xff]
    %v110 = vld [vmem:[#allocation3 + $0x80] sm:$0xff]
    %v112 = vsel %vm83, %v41, 0
    %114 = vmatpush.msra.mxu0 0.0
    %115 = vmatpush.msra.mxu0 0.0
    %116 = vmatpush.msra.mxu0 0.0
    %117 = vmatpush.msra.mxu0 0.0
    %118 = vmatpush.msra.mxu0 0.0
    %119 = vmatpush.msra.mxu0 0.0
    %120 = vmatpush.msra.mxu0 0.0
    %121 = vmatpush.msra.mxu0 0.0
    %122 = vmatpush.msra.mxu0 0.0
    %123 = vmatpush.msra.mxu0 0.0
    %124 = vmatpush.msra.mxu0 0.0
    %125 = vmatpush.msra.mxu0 0.0
    %126 = vmatpush.msra.mxu0 %v110
    %127 = vmatpush.msra.mxu0 %v109
    %128 = vmatpush.msra.mxu0 %v108
    %129 = vmatpush.msra.mxu0 %v107
    %130 = vmatmul.f32.gmra.mxu0 %v112
    %v131 = vpop.f32.mrf.mxu0
    %v132 = vadd.f32 0.0, %v131
    %133 = vdwg.mxu0
    %v134 = vadd.f32 %v105, %v132
    %v135 = vadd.f32 %v134, %v42
    %vm136 = vcmask 73728
    %v137 = vsel %vm136, %v135, -inf
    %138 = vmax.xlane.f32.xlu0 %v137
    %v139 = vpop.xlane.xlu0 %138
    %v140 = vsub.f32 %v135, %v139
    %v141 = vmul.f32 %v140, 1.442695
    %v142 = vpow.pop %v141
    %v143 = vsel %vm136, %v142, 0.0
    %144 = vadd.xlane.f32.xlu0 %v143
    %v145 = vpop.xlane.xlu0 %144
    %v146 = vrcp.pop %v145
    %v147 = vmul.f32 %v145, %v146
    %v148 = vsub.f32 1.0, %v147
    %v149 = vmul.f32 %v146, %v148
    %v150 = vadd.f32 %v146, %v149
    %vm151 = vweird.f32 %v145
    %vm152 = vweird.f32 %v146
    %vm153 = vmor %vm151, %vm152
    %v154 = vsel %vm153, %v146, %v150
    %v155 = vand.u32 2147483647, %v145
    %vm156 = vcmp.eq.f32.partialorder %v155, 8.507059e+37
    %v157 = vand.u32 %v145, 2147483648
    %v158 = vor.u32 1.1754944e-38, %v157
    %v159 = vsel %vm156, %v158, %v154
    %v160 = vmul.f32 %v142, %v159
    %v161 = vld [vmem:[%s2] sm:$0xff]
    %v162 = vld [vmem:[%s2 + $0x8] sm:$0x3]
    %vm163 = vcmask 80896
    %v165 = vsel %vm163, %v160, 0
    %vm167 = vcmask 1041408
    %v169 = vsel %vm167, %v162, 0
    %171 = vmatpush.msra.mxu0 0.0
    %172 = vmatpush.msra.mxu0 0.0
    %173 = vmatpush.msra.mxu0 0.0
    %174 = vmatpush.msra.mxu0 0.0
    %175 = vmatpush.msra.mxu0 0.0
    %176 = vmatpush.msra.mxu0 0.0
    %177 = vmatpush.msra.mxu0 0.0
    %178 = vmatpush.msra.mxu0 0.0
    %179 = vmatpush.msra.mxu0 0.0
    %180 = vmatpush.msra.mxu0 0.0
    %181 = vmatpush.msra.mxu0 0.0
    %182 = vmatpush.msra.mxu0 0.0
    %183 = vmatpush.msra.mxu0 0.0
    %184 = vmatpush.msra.mxu0 0.0
    %185 = vmatpush.msra.mxu0 %v169
    %186 = vmatpush.msra.mxu0 %v161
    %187 = vmatmul.f32.gmra.mxu0 %v165
    %v188 = vpop.f32.mrf.mxu0
    %v189 = vadd.f32 0.0, %v188
    %190 = vdwg.mxu0
    %v191 = vld [vmem:[#allocation3 + $0x18] sm:$0xff]
    %v192 = vld [vmem:[#allocation3 + $0x40] sm:$0xff]
    %v193 = vld [vmem:[#allocation3 + $0x68] sm:$0xff]
    %v194 = vld [vmem:[#allocation3 + $0x90] sm:$0xff]
    %v196 = vsel %vm83, %v189, 0
    %198 = vmatpush.msra.mxu0 0.0
    %199 = vmatpush.msra.mxu0 0.0
    %200 = vmatpush.msra.mxu0 0.0
    %201 = vmatpush.msra.mxu0 0.0
    %202 = vmatpush.msra.mxu0 0.0
    %203 = vmatpush.msra.mxu0 0.0
    %204 = vmatpush.msra.mxu0 0.0
    %205 = vmatpush.msra.mxu0 0.0
    %206 = vmatpush.msra.mxu0 0.0
    %207 = vmatpush.msra.mxu0 0.0
    %208 = vmatpush.msra.mxu0 0.0
    %209 = vmatpush.msra.mxu0 0.0
    %210 = vmatpush.msra.mxu0 %v194
    %211 = vmatpush.msra.mxu0 %v193
    %212 = vmatpush.msra.mxu0 %v192
    %213 = vmatpush.msra.mxu0 %v191
    %214 = vmatmul.f32.gmra.mxu0 %v196
    %v215 = vpop.f32.mrf.mxu0
    %v216 = vadd.f32 0.0, %v215
    %217 = vdwg.mxu0
    %219 = vrot.lane.b32.xlu0 %v216, 10
    %v220 = vpop.permute.xlu0 %219
    %v222 = vadd.f32 %v105, %v220
    %v223 = vadd.f32 %v222, %v42
    %v224 = vmax.f32 %v223, 0.0
    %v225 = vld [vmem:[#allocation3 + $0x10] sm:$0xff]
    %v226 = vld [vmem:[#allocation3 + $0x38] sm:$0xff]
    %v227 = vld [vmem:[#allocation3 + $0x60] sm:$0xff]
    %v228 = vld [vmem:[#allocation3 + $0x88] sm:$0xff]
    %230 = vrot.lane.b32.xlu0 %v224, 118
    %v231 = vpop.permute.xlu0 %230
    %v232 = vsel %vm83, %v231, 0
    %234 = vmatpush.msra.mxu0 0.0
    %235 = vmatpush.msra.mxu0 0.0
    %236 = vmatpush.msra.mxu0 0.0
    %237 = vmatpush.msra.mxu0 0.0
    %238 = vmatpush.msra.mxu0 0.0
    %239 = vmatpush.msra.mxu0 0.0
    %240 = vmatpush.msra.mxu0 0.0
    %241 = vmatpush.msra.mxu0 0.0
    %242 = vmatpush.msra.mxu0 0.0
    %243 = vmatpush.msra.mxu0 0.0
    %244 = vmatpush.msra.mxu0 0.0
    %245 = vmatpush.msra.mxu0 0.0
    %246 = vmatpush.msra.mxu0 %v228
    %247 = vmatpush.msra.mxu0 %v227
    %248 = vmatpush.msra.mxu0 %v226
    %249 = vmatpush.msra.mxu0 %v225
    %250 = vmatmul.f32.gmra.mxu0 %v232
    %v251 = vpop.f32.mrf.mxu0
    %v252 = vadd.f32 0.0, %v251
    %253 = vdwg.mxu0
    %v255 = vrot.slane %v42, 1
    %v257 = vadd.f32 %v252, %v255
    %v258 = vrot.slane %v42, 2
    %259 = vrot.lane.b32.xlu0 %v258, 10
    %v260 = vpop.permute.xlu0 %259
    %v262 = vadd.f32 %v132, %v260
    %264 = vrot.lane.b32.xlu0 %v262, 118
    %v265 = vpop.permute.xlu0 %264
    %v267 = vadd.f32 %v257, %v265
    %v268 = vxor.u32 %v267, 2147483648
    %v269 = vmul.f32 %v268, 1.442695
    %v270 = vpow.pop %v269
    %v271 = vadd.f32 %v270, 1.0
    %v272 = vrcp.pop %v271
    %v273 = vmul.f32 %v271, %v272
    %v274 = vsub.f32 1.0, %v273
    %v275 = vmul.f32 %v272, %v274
    %v276 = vadd.f32 %v272, %v275
    %vm277 = vweird.f32 %v271
    %vm278 = vweird.f32 %v272
    %vm279 = vmor %vm277, %vm278
    %v280 = vsel %vm279, %v272, %v276
    %v281 = vand.u32 2147483647, %v271
    %vm282 = vcmp.eq.f32.partialorder %v281, 8.507059e+37
    %v283 = vand.u32 %v271, 2147483648
    %v284 = vor.u32 1.1754944e-38, %v283
    %v285 = vsel %vm282, %v284, %v280
    %v286 = vmul.f32 1.0, %v285
    %287 = vrot.lane.b32.xlu0 %v262, 54
    %v288 = vpop.permute.xlu0 %287
    %v290 = vmul.f32 %v286, %v288
    %292 = vrot.lane.b32.xlu0 %v290, 64
    %v293 = vpop.permute.xlu0 %292
    %v295 = vadd.f32 %v257, %v293
    %v296 = vtanh.pop %v295
    %v297 = vsub.f32 1.0, %v286
    %299 = vrot.lane.b32.xlu0 %v296, 96
    %v300 = vpop.permute.xlu0 %299
    %v302 = vmul.f32 %v297, %v300
    %v303 = vperm.slane %v41, 0
    %304 = vrot.lane.b32.xlu0 %v303, 32
    %v305 = vpop.permute.xlu0 %304
    %v307 = vmul.f32 %v286, %v305
    %v308 = vadd.f32 %v302, %v307
    %v309 = vld [vmem:[#allocation3 + $0x20] sm:$0xff]
    %v310 = vld [vmem:[#allocation3 + $0x48] sm:$0xff]
    %v311 = vld [vmem:[#allocation3 + $0x70] sm:$0xff]
    %v312 = vld [vmem:[#allocation3 + $0x98] sm:$0xff]
    %314 = vrot.lane.b32.xlu0 %v308, 96
    %v315 = vpop.permute.xlu0 %314
    %v316 = vsel %vm83, %v315, 0
    %318 = vmatpush.msra.mxu0 0.0
    %319 = vmatpush.msra.mxu0 0.0
    %320 = vmatpush.msra.mxu0 0.0
    %321 = vmatpush.msra.mxu0 0.0
    %322 = vmatpush.msra.mxu0 0.0
    %323 = vmatpush.msra.mxu0 0.0
    %324 = vmatpush.msra.mxu0 0.0
    %325 = vmatpush.msra.mxu0 0.0
    %326 = vmatpush.msra.mxu0 0.0
    %327 = vmatpush.msra.mxu0 0.0
    %328 = vmatpush.msra.mxu0 0.0
    %329 = vmatpush.msra.mxu0 0.0
    %330 = vmatpush.msra.mxu0 %v312
    %331 = vmatpush.msra.mxu0 %v311
    %332 = vmatpush.msra.mxu0 %v310
    %333 = vmatpush.msra.mxu0 %v309
    %334 = vmatmul.f32.gmra.mxu0 %v316
    %v335 = vpop.f32.mrf.mxu0
    %v336 = vadd.f32 0.0, %v335
    %337 = vdwg.mxu0
    %v338 = vrot.slane %v42, 3
    %v340 = vadd.f32 %v336, %v338
    %vm341 = vcmask 319488
    %v342 = vsel %vm341, %v340, -inf
    %343 = vmax.xlane.f32.xlu0 %v342
    %v344 = vpop.xlane.xlu0 %343
    %v345 = vsub.f32 %v340, %v344
    %v346 = vmul.f32 %v345, 1.442695
    %v347 = vpow.pop %v346
    %v348 = vsel %vm341, %v347, 0.0
    %349 = vadd.xlane.f32.xlu0 %v348
    %v350 = vpop.xlane.xlu0 %349
    %v351 = vlog2.pop %v350
    %v352 = vmul.f32 %v351, 0.6931472
    %v353 = vsub.f32 %v345, %v352
    %354 = vst.msk [vmem:[#allocation6] sm:$0x1] %vm341, %v353
    %355 = vrot.lane.b32.xlu0 %v308, 8
    %v356 = vpop.permute.xlu0 %355
    %vm358 = vcmask 581952
    %359 = vst.msk [vmem:[#allocation6] sm:$0x1] %vm358, %v356
    %360 = vrot.lane.b32.xlu0 %v160, 72
    %v361 = vpop.permute.xlu0 %360
    %vm363 = vcmask 664128
    %364 = vst.msk [vmem:[#allocation6] sm:$0x1] %vm363, %v361
    %vm365 = vcmask 1041040
    %366 = vst.msk [vmem:[#allocation6] sm:$0x1] %vm365, 0.0
    // Predicated region
    $region30: #{tpu_custom_call.1} parent=1 // pred_check
      _
    $region31: #{tpu_custom_call.1} parent=1 // pred_check_branch
      %368 = sbr.rel (0) target = $region33
    $region32: #{tpu_custom_call.1} parent=1 // pred_region
      %370 = vsyncadd [#allocation5], 0
      %s372 = sshll.u32 [#allocation6], 4
      %s373 = int_to_ptr.vmem [resolvable:$true] %s372
      %s374 = sshll.u32 %s6, 4
      %s375 = int_to_ptr.hbm [resolvable:$true] %s374
      %377 = dma.vmem_to_hbm [thread:$0]  %s373, 16, %s375, [#allocation5]
    $region33: #{tpu_custom_call.1} parent=1 // pred_fallthru
      _
    // Predicated region
    $region34: #{tpu_custom_call.1} parent=1 // pred_check
      _
    $region35: #{tpu_custom_call.1} parent=1 // pred_check_branch
      %379 = sbr.rel (0) target = $region37
    $region36: #{tpu_custom_call.1} parent=1 // pred_region
      %381 = dma.done [#allocation5], 16
    $region37: #{tpu_custom_call.1} parent=1 // pred_fallthru
      _
    %382 = vsyncpa [#allocation4], 1
    %383 = vsyncpa [#allocation5], 1

</llo_original>
